<compile_context>
chip_gen: v6e
topology: v6e:2x2x1
jax: 0.10.0
libtpu: 0.0.40
codegen_flags: <defaults>
</compile_context>

<pallas_src>
import jax
import jax.numpy as jnp
from jax.experimental import pallas as pl
from jax.experimental.pallas import tpu as pltpu

NEG_SLOPE = 0.01  # nn.LeakyReLU() default
LANE = 128
SUBLANE = 8


def _round_up(x, m):
    return (x + m - 1) // m * m


# ----------------------------- kernels ------------------------------------ #
def _feature_transform_kernel(x_ref, w_ref, o_ref):
    """XW = X @ W1  (row-tiled, bf16 in, f32 MXU accumulate, bf16 out)."""
    o_ref[...] = jnp.dot(
        x_ref[...], w_ref[...], preferred_element_type=jnp.float32
    ).astype(o_ref.dtype)


def _agg_act_transform_kernel(a_ref, xw_ref, b1_ref, w2_ref, o_ref, acc_ref):
    """HW2 = LeakyReLU(A @ XW + b1) @ W2, accumulated over column tiles of A."""
    @pl.when(pl.program_id(1) == 0)
    def _():
        acc_ref[...] = jnp.zeros_like(acc_ref)

    acc_ref[...] += jnp.dot(
        a_ref[...], xw_ref[...], preferred_element_type=jnp.float32
    )

    @pl.when(pl.program_id(1) == pl.num_programs(1) - 1)
    def _():
        h = acc_ref[...] + b1_ref[...]                 # bias add in f32 (VPU)
        h = jnp.where(h > 0, h, NEG_SLOPE * h)         # LeakyReLU in f32 (VPU)
        o_ref[...] = jnp.dot(
            h.astype(w2_ref.dtype), w2_ref[...],
            preferred_element_type=jnp.float32,
        ).astype(o_ref.dtype)


def _agg_bias_kernel(a_ref, hw_ref, b2_ref, o_ref):
    """OUT = A @ HW2 + b2; accumulates directly in the resident f32 output."""
    k = pl.program_id(1)

    @pl.when(k == 0)
    def _():
        o_ref[...] = jnp.zeros_like(o_ref)

    o_ref[...] += jnp.dot(
        a_ref[...], hw_ref[...], preferred_element_type=jnp.float32
    )

    @pl.when(k == pl.num_programs(1) - 1)
    def _():
        o_ref[...] = o_ref[...] + b2_ref[...]          # broadcast bias add


# ----------------------------- wrapper ------------------------------------ #
def gcn_decoder(a_norm, x, w1, b1, w2, b2,
                *, compute_dtype=jnp.bfloat16,
                vmem_limit_bytes=64 * 1024 * 1024):
    n, c_in = x.shape
    hidden = w1.shape[1]
    c_out = w2.shape[1]

    # Lane-dense channel padding (zero cols/rows, exact, sliced off at end).
    cip = _round_up(c_in, LANE)
    hp = _round_up(hidden, LANE)
    cp = _round_up(c_out, LANE)

    # Adaptive square adjacency tile: MXU-native 128 minimum, growing with N
    # to amortize per-grid-step overhead (~0.35us/step) on large graphs.
    if n <= LANE:
        tile = _round_up(n, SUBLANE)
    elif n >= 4096:
        tile = 512
    elif n >= 1024:
        tile = 256
    else:
        tile = LANE
    n_pad = _round_up(n, tile)
    tm = tk = tile
    gm, gk = n_pad // tm, n_pad // tk

    cdt = compute_dtype
    a_p = jnp.zeros((n_pad, n_pad), cdt).at[:n, :n].set(a_norm.astype(cdt))
    x_p = jnp.zeros((n_pad, cip), cdt).at[:n, :c_in].set(x.astype(cdt))
    w1_p = jnp.zeros((cip, hp), cdt).at[:c_in, :hidden].set(w1.astype(cdt))
    b1_p = jnp.zeros((1, hp), jnp.float32).at[:, :hidden].set(
        b1.reshape(1, -1).astype(jnp.float32))
    w2_p = jnp.zeros((hp, cp), cdt).at[:hidden, :c_out].set(w2.astype(cdt))
    b2_p = jnp.zeros((1, cp), jnp.float32).at[:, :c_out].set(
        b2.reshape(1, -1).astype(jnp.float32))

    cparams_1d = pltpu.CompilerParams(
        dimension_semantics=("parallel",),
        vmem_limit_bytes=vmem_limit_bytes)
    cparams_2d = pltpu.CompilerParams(
        dimension_semantics=("parallel", "arbitrary"),
        vmem_limit_bytes=vmem_limit_bytes)

    # --- stage 0: XW = X @ W1 (feature transform, row-tiled) --------------- #
    xw = pl.pallas_call(
        _feature_transform_kernel,
        out_shape=jax.ShapeDtypeStruct((n_pad, hp), cdt),
        grid_spec=pltpu.PrefetchScalarGridSpec(
            num_scalar_prefetch=0,
            grid=(gm,),
            in_specs=[pl.BlockSpec((tm, cip), lambda i: (i, 0)),
                      pl.BlockSpec((cip, hp), lambda i: (0, 0))],
            out_specs=pl.BlockSpec((tm, hp), lambda i: (i, 0))),
        compiler_params=cparams_1d,
        cost_estimate=pl.CostEstimate(
            flops=2 * n_pad * cip * hp,
            transcendentals=0,
            bytes_accessed=2 * (n_pad * cip + cip * hp + n_pad * hp)),
    )(x_p, w1_p)

    # --- stage 1: HW2 = LeakyReLU(A @ XW + b1) @ W2 ------------------------ #
    hw2 = pl.pallas_call(
        _agg_act_transform_kernel,
        out_shape=jax.ShapeDtypeStruct((n_pad, cp), cdt),
        grid_spec=pltpu.PrefetchScalarGridSpec(
            num_scalar_prefetch=0,
            grid=(gm, gk),
            in_specs=[pl.BlockSpec((tm, tk), lambda i, k: (i, k)),
                      pl.BlockSpec((tk, hp), lambda i, k: (k, 0)),
                      pl.BlockSpec((1, hp), lambda i, k: (0, 0)),
                      pl.BlockSpec((hp, cp), lambda i, k: (0, 0))],
            out_specs=pl.BlockSpec((tm, cp), lambda i, k: (i, 0)),
            scratch_shapes=[pltpu.VMEM((tm, hp), jnp.float32)]),
        compiler_params=cparams_2d,
        cost_estimate=pl.CostEstimate(
            flops=2 * n_pad * n_pad * hp + 2 * n_pad * hp * cp,
            transcendentals=0,
            bytes_accessed=2 * (n_pad * n_pad + n_pad * hp + hp * cp
                                + n_pad * cp)),
    )(a_p, xw, b1_p, w2_p)

    # --- stage 2: OUT = A @ HW2 + b2 (accumulate in resident f32 output) --- #
    out_p = pl.pallas_call(
        _agg_bias_kernel,
        out_shape=jax.ShapeDtypeStruct((n_pad, cp), jnp.float32),
        grid_spec=pltpu.PrefetchScalarGridSpec(
            num_scalar_prefetch=0,
            grid=(gm, gk),
            in_specs=[pl.BlockSpec((tm, tk), lambda i, k: (i, k)),
                      pl.BlockSpec((tk, cp), lambda i, k: (k, 0)),
                      pl.BlockSpec((1, cp), lambda i, k: (0, 0))],
            out_specs=pl.BlockSpec((tm, cp), lambda i, k: (i, 0))),
        compiler_params=cparams_2d,
        cost_estimate=pl.CostEstimate(
            flops=2 * n_pad * n_pad * cp,
            transcendentals=0,
            bytes_accessed=2 * (n_pad * n_pad + n_pad * cp)
                           + 4 * n_pad * cp),
    )(a_p, hw2, b2_p)

    return out_p[:n, :c_out]


# ------------------------- plain-JAX glue / test --------------------------- #
def normalized_adjacency(edge_index, num_nodes):
    """Dense D^-1/2 (A + I) D^-1/2 from a [2, E] edge_index (PyG GCNConv)."""
    src, dst = edge_index[0], edge_index[1]
    adj = jnp.zeros((num_nodes, num_nodes), jnp.float32)
    adj = adj.at[dst, src].add(1.0)                     # msg flows src -> dst
    adj = adj + jnp.eye(num_nodes, dtype=jnp.float32)   # self-loops
    deg = adj.sum(axis=1)
    d_inv_sqrt = jnp.where(deg > 0, 1.0 / jnp.sqrt(deg), 0.0)
    return d_inv_sqrt[:, None] * adj * d_inv_sqrt[None, :]


def reference_f32(a_norm, x, w1, b1, w2, b2):
    h = a_norm @ (x @ w1) + b1.reshape(1, -1)
    h = jnp.where(h > 0, h, NEG_SLOPE * h)
    return a_norm @ (h @ w2) + b2.reshape(1, -1)


if __name__ == "__main__":
    num_nodes = 8
    latent_channels = 32
    hidden_channels = 32
    out_channels = 16

    key = jax.random.PRNGKey(0)
    k_x, k_e, k_w1, k_w2, k_b1, k_b2 = jax.random.split(key, 6)

    # Node latents z: [N, latent_channels]
    z = jax.random.normal(k_x, (num_nodes, latent_channels), jnp.float32)

    # Deterministic small graph: ring edges + a few extra ones, [2, E]
    ring_src = jnp.arange(num_nodes)
    ring_dst = (ring_src + 1) % num_nodes
    rand_src = jax.random.randint(k_e, (4,), 0, num_nodes)
    rand_dst = (rand_src + 3) % num_nodes
    edge_index = jnp.stack(
        [jnp.concatenate([ring_src, rand_src]),
         jnp.concatenate([ring_dst, rand_dst])], axis=0).astype(jnp.int32)

    def glorot(k, fan_in, fan_out):
        lim = jnp.sqrt(6.0 / (fan_in + fan_out))
        return jax.random.uniform(k, (fan_in, fan_out), jnp.float32, -lim, lim)

    w1 = glorot(k_w1, latent_channels, hidden_channels)
    w2 = glorot(k_w2, hidden_channels, out_channels)
    # Small nonzero biases to exercise the bias-add path.
    b1 = 0.1 * jax.random.normal(k_b1, (hidden_channels,), jnp.float32)
    b2 = 0.1 * jax.random.normal(k_b2, (out_channels,), jnp.float32)

    a_norm = normalized_adjacency(edge_index, num_nodes)

    out = gcn_decoder(a_norm, z, w1, b1, w2, b2)
    out = jax.block_until_ready(out)

    ref = reference_f32(a_norm, z, w1, b1, w2, b2)
    assert out.shape == (num_nodes, out_channels)
    # bf16 MXU inputs with f32 accumulation: allow bf16-level rounding error.
    assert jnp.allclose(out, ref, atol=5e-2, rtol=5e-2), "mismatch vs reference"
    print("KERNEL_OK")
</pallas_src>

<mosaic_0001>
module attributes {stable_mosaic.version = 11 : i64} {
  func.func @_feature_transform_kernel(%arg0: i32, %arg1: memref<8x128xbf16, #tpu.memory_space<vmem>>, %arg2: memref<128x128xbf16, #tpu.memory_space<vmem>>, %arg3: memref<8x128xbf16, #tpu.memory_space<vmem>>) attributes {dimension_semantics = [#tpu.dimension_semantics<parallel>], iteration_bounds = array<i64: 1>, scalar_prefetch = 0 : i64, scratch_operands = 0 : i64, tpu.core_type = #tpu.core_type<tc>, window_params = [{transform_indices = @transform_0, window_bounds = array<i64: 8, 128>}, {pipeline_mode = #tpu.pipeline_mode<synchronous>, transform_indices = @transform_1, window_bounds = array<i64: 128, 128>}, {transform_indices = @transform_2, window_bounds = array<i64: 8, 128>}]} {
    %c0 = arith.constant 0 : index
    %c0_0 = arith.constant 0 : index
    %0 = vector.load %arg1[%c0, %c0_0] : memref<8x128xbf16, #tpu.memory_space<vmem>>, vector<8x128xbf16>
    %c0_1 = arith.constant 0 : index
    %c0_2 = arith.constant 0 : index
    %1 = vector.load %arg2[%c0_1, %c0_2] : memref<128x128xbf16, #tpu.memory_space<vmem>>, vector<128x128xbf16>
    %cst = arith.constant dense<0.000000e+00> : vector<8x128xf32>
    %2 = tpu.matmul %0, %1, %cst {dimension_numbers = #tpu.dot_dimension_numbers<[1], [0], [0], [1], [0, 0, 1, 1], [], []>} : vector<8x128xbf16>, vector<128x128xbf16>, vector<8x128xf32> -> vector<8x128xf32>
    %3 = arith.truncf %2 : vector<8x128xf32> to vector<8x128xbf16>
    %c0_3 = arith.constant 0 : index
    %c0_4 = arith.constant 0 : index
    %4 = vector.load %arg3[%c0_3, %c0_4] : memref<8x128xbf16, #tpu.memory_space<vmem>>, vector<8x128xbf16>
    tpu.vector_store %arg3[%c0_3, %c0_4], %3 {strides = array<i32>} : memref<8x128xbf16, #tpu.memory_space<vmem>>, vector<8x128xbf16>,
    return
  }
  func.func @transform_0(%arg0: i32) -> (i32, i32) {
    %c0_i32 = arith.constant 0 : i32
    %c0_i32_0 = arith.constant 0 : i32
    return %arg0, %c0_i32 : i32, i32
  }
  func.func @transform_1(%arg0: i32) -> (i32, i32) {
    %c0_i32 = arith.constant 0 : i32
    %c0_i32_0 = arith.constant 0 : i32
    %c0_i32_1 = arith.constant 0 : i32
    return %c0_i32, %c0_i32_0 : i32, i32
  }
  func.func @transform_2(%arg0: i32) -> (i32, i32) {
    %c0_i32 = arith.constant 0 : i32
    %c0_i32_0 = arith.constant 0 : i32
    return %arg0, %c0_i32 : i32, i32
  }
}

</mosaic_0001>

<llo_original>
// kernel: tpu_custom_call.1
$region0: #{tpu_custom_call.1}
  #allocation0 [shape = 'u32[]', space=smem, size = 0x4, offset = 0x4, fixed_abs, tag = 'smem constant byte address 0x4 - core index']
  #allocation1 [shape = 'u32[144,128]{1,0:T(1,128)}', space=vmem, size = 0x12000, scoped, tag = 'internal scratch']
  %s0 = inlined_call_operand.hbm [shape: bf16[8,128], index: 0, kind: input, shape index: {}]
  %s1 = inlined_call_operand.hbm [shape: bf16[128,128], index: 1, kind: input, shape index: {}]
  %s2 = inlined_call_operand.hbm [shape: bf16[8,128], index: 2, kind: output, shape index: {}]
  %s3 = sld [smem:[#allocation0]]
  $region26: #{tpu_custom_call.1} parent=0
    _
  %s5 = ssub.s32 1, %s3
  %s6 = scalar_select 0, %s5, %s3
  $region1: #{tpu_custom_call.1} parent=0
    #allocation2 [shape = 'u8[2048]{0}', space=vmem, size = 0x800, scoped, tag = 'input window, operand 0, single buffered']
    #allocation3 [shape = 's32[1]{0}', space=sflag, size = 0x4, scoped, tag = 'scoped memory for tpu_custom_call.1']
    #allocation4 [shape = 's32[1]{0}', space=sflag, size = 0x4, scoped, tag = 'scoped memory for tpu_custom_call.1']
    #allocation5 [shape = 'u8[32768]{0}', space=vmem, size = 0x8000, scoped, tag = 'input window, operand 1, single buffered']
    #allocation6 [shape = 's32[1]{0}', space=sflag, size = 0x4, scoped, tag = 'scoped memory for tpu_custom_call.1']
    #allocation7 [shape = 'u8[2048]{0}', space=vmem, size = 0x800, scoped, tag = 'output window, operand 0, single buffered']
    %7 = vsyncpa [#allocation3], 0
    %8 = vsyncpa [#allocation6], 0
    %9 = vsyncpa [#allocation4], 0
    // Predicated region
    $region2: #{tpu_custom_call.1} parent=1 // pred_check
      _
    $region3: #{tpu_custom_call.1} parent=1 // pred_check_branch
      %11 = sbr.rel (0) target = $region5
    $region4: #{tpu_custom_call.1} parent=1 // pred_region
      %s13 = ssub.s32 64, 64
      %14 = vsyncadd [#allocation3], %s13
      %s16 = sshll.u32 [#allocation2], 4
      %s17 = int_to_ptr.vmem [resolvable:$true] %s16
      %19 = dma.hbm_to_vmem [thread:$0]  %s0, 64, %s17, [#allocation3]
    $region5: #{tpu_custom_call.1} parent=1 // pred_fallthru
      _
    // Predicated region
    $region6: #{tpu_custom_call.1} parent=1 // pred_check
      _
    $region7: #{tpu_custom_call.1} parent=1 // pred_check_branch
      %21 = sbr.rel (0) target = $region9
    $region8: #{tpu_custom_call.1} parent=1 // pred_region
      %s23 = ssub.s32 1024, 1024
      %24 = vsyncadd [#allocation6], %s23
      %s25 = sshll.u32 [#allocation5], 4
      %s26 = int_to_ptr.vmem [resolvable:$true] %s25
      %31 = dma.hbm_to_vmem [thread:$0]  %s1, 1024, %s26, [#allocation6], 64, 64, 4
    $region9: #{tpu_custom_call.1} parent=1 // pred_fallthru
      _
    // Predicated region
    $region10: #{tpu_custom_call.1} parent=1 // pred_check
      _
    $region11: #{tpu_custom_call.1} parent=1 // pred_check_branch
      %33 = sbr.rel (0) target = $region13
    $region12: #{tpu_custom_call.1} parent=1 // pred_region
      %34 = dma.done [#allocation3], 64
    $region13: #{tpu_custom_call.1} parent=1 // pred_fallthru
      _
    // Predicated region
    $region14: #{tpu_custom_call.1} parent=1 // pred_check
      _
    $region15: #{tpu_custom_call.1} parent=1 // pred_check_branch
      %36 = sbr.rel (0) target = $region17
    $region16: #{tpu_custom_call.1} parent=1 // pred_region
      %37 = dma.done [#allocation6], 1024
    $region17: #{tpu_custom_call.1} parent=1 // pred_fallthru
      _
    %v39 = vld [vmem:[#allocation2] sm:$0xf]
    %v40 = vld [vmem:[#allocation5] sm:$0xf]
    %v41 = vld [vmem:[#allocation5 + $0x4] sm:$0xf]
    %v42 = vld [vmem:[#allocation5 + $0x8] sm:$0xf]
    %v43 = vld [vmem:[#allocation5 + $0xc] sm:$0xf]
    %v44 = vld [vmem:[#allocation5 + $0x10] sm:$0xf]
    %v45 = vld [vmem:[#allocation5 + $0x14] sm:$0xf]
    %v46 = vld [vmem:[#allocation5 + $0x18] sm:$0xf]
    %v47 = vld [vmem:[#allocation5 + $0x1c] sm:$0xf]
    %v48 = vld [vmem:[#allocation5 + $0x20] sm:$0xf]
    %v49 = vld [vmem:[#allocation5 + $0x24] sm:$0xf]
    %v50 = vld [vmem:[#allocation5 + $0x28] sm:$0xf]
    %v51 = vld [vmem:[#allocation5 + $0x2c] sm:$0xf]
    %v52 = vld [vmem:[#allocation5 + $0x30] sm:$0xf]
    %v53 = vld [vmem:[#allocation5 + $0x34] sm:$0xf]
    %v54 = vld [vmem:[#allocation5 + $0x38] sm:$0xf]
    %v55 = vld [vmem:[#allocation5 + $0x3c] sm:$0xf]
    %v72 = vunpack.c.l.b16 %v40
    %v73 = vunpack.c.l.b16 %v41
    %v74 = vunpack.c.l.b16 %v42
    %v75 = vunpack.c.l.b16 %v43
    %v76 = vunpack.c.l.b16 %v44
    %v77 = vunpack.c.l.b16 %v45
    %v78 = vunpack.c.l.b16 %v46
    %v79 = vunpack.c.l.b16 %v47
    %v80 = vunpack.c.l.b16 %v48
    %v81 = vunpack.c.l.b16 %v49
    %v82 = vunpack.c.l.b16 %v50
    %v83 = vunpack.c.l.b16 %v51
    %v84 = vunpack.c.l.b16 %v52
    %v85 = vunpack.c.l.b16 %v53
    %v86 = vunpack.c.l.b16 %v54
    %v87 = vunpack.c.l.b16 %v55
    %v88 = vpack.c.b16 %v73, %v72
    %v89 = vpack.c.b16 %v75, %v74
    %v90 = vpack.c.b16 %v77, %v76
    %v91 = vpack.c.b16 %v79, %v78
    %v92 = vpack.c.b16 %v81, %v80
    %v93 = vpack.c.b16 %v83, %v82
    %v94 = vpack.c.b16 %v85, %v84
    %v95 = vpack.c.b16 %v87, %v86
    %104 = vmatprep.subr.bf16.mxu0 0
    %105 = vmatpush1.bf16.msra.mxu0 %v95
    %106 = vmatprep.subr.bf16.mxu0 0
    %107 = vmatpush1.bf16.msra.mxu0 %v94
    %108 = vmatprep.subr.bf16.mxu0 0
    %109 = vmatpush1.bf16.msra.mxu0 %v93
    %110 = vmatprep.subr.bf16.mxu0 0
    %111 = vmatpush1.bf16.msra.mxu0 %v92
    %112 = vmatprep.subr.bf16.mxu0 0
    %113 = vmatpush1.bf16.msra.mxu0 %v91
    %114 = vmatprep.subr.bf16.mxu0 0
    %115 = vmatpush1.bf16.msra.mxu0 %v90
    %116 = vmatprep.subr.bf16.mxu0 0
    %117 = vmatpush1.bf16.msra.mxu0 %v89
    %118 = vmatprep.subr.bf16.mxu0 0
    %119 = vmatpush1.bf16.msra.mxu0 %v88
    %120 = vmatprep.subr.bf16.mxu0 0
    %121 = vmatpush2.bf16.msra.mxu0 0
    %122 = vmatprep.subr.bf16.mxu0 0
    %123 = vmatpush2.bf16.msra.mxu0 0
    %124 = vmatprep.subr.bf16.mxu0 0
    %125 = vmatpush2.bf16.msra.mxu0 0
    %126 = vmatprep.subr.bf16.mxu0 0
    %127 = vmatpush2.bf16.msra.mxu0 0
    %128 = vmatprep.subr.bf16.mxu0 0
    %129 = vmatpush2.bf16.msra.mxu0 0
    %130 = vmatprep.subr.bf16.mxu0 0
    %131 = vmatpush2.bf16.msra.mxu0 0
    %132 = vmatprep.subr.bf16.mxu0 0
    %133 = vmatpush2.bf16.msra.mxu0 0
    %134 = vmatprep.subr.bf16.mxu0 0
    %135 = vmatpush2.bf16.msra.mxu0 0
    %136 = vmatprep.mubr.bf16.mxu0 0
    %137 = vmatmul.mubr.bf16.gmra.mxu0 %v39
    %v138 = vpop.f32.mrf.mxu0
    %v139 = vadd.f32 0.0, %v138
    %v140 = vpop.f32.mrf.mxu0
    %v141 = vpop.f32.mrf.mxu0
    %v142 = vpop.f32.mrf.mxu0
    %143 = vdwg.mxu0
    %v144 = vpack.c.bf16 %v139, %v139
    %145 = vst [vmem:[#allocation7] sm:$0xf] %v144
    // Predicated region
    $region18: #{tpu_custom_call.1} parent=1 // pred_check
      _
    $region19: #{tpu_custom_call.1} parent=1 // pred_check_branch
      %147 = sbr.rel (0) target = $region21
    $region20: #{tpu_custom_call.1} parent=1 // pred_region
      %s149 = ssub.s32 64, 64
      %150 = vsyncadd [#allocation4], %s149
      %s152 = sshll.u32 [#allocation7], 4
      %s153 = int_to_ptr.vmem [resolvable:$true] %s152
      %155 = dma.vmem_to_hbm [thread:$0]  %s153, 64, %s2, [#allocation4]
    $region21: #{tpu_custom_call.1} parent=1 // pred_fallthru
      _
    // Predicated region
    $region22: #{tpu_custom_call.1} parent=1 // pred_check
      _
    $region23: #{tpu_custom_call.1} parent=1 // pred_check_branch
      %157 = sbr.rel (0) target = $region25
    $region24: #{tpu_custom_call.1} parent=1 // pred_region
      %158 = dma.done [#allocation4], 64
    $region25: #{tpu_custom_call.1} parent=1 // pred_fallthru
      _
    %159 = vsyncpa [#allocation3], 1
    %160 = vsyncpa [#allocation6], 1
    %161 = vsyncpa [#allocation4], 1

</llo_original>
